<compile_context>
chip_gen: v7x
topology: tpu7x:2x2x1
jax: 0.10.0
libtpu: 0.0.40
codegen_flags: <defaults>
</compile_context>

<pallas_src>
import jax
import jax.numpy as jnp
from jax.experimental import pallas as pl
from jax.experimental.pallas import tpu as pltpu

_LANE = 128          # lane width (output feature padding granule)
_GRANULE = 256       # MXU M granularity on v6e/v7x (128 suffices on v5e)


def _sigmoid(z):
    # Single-transcendental sigmoid: one EUP tanh push per element; the
    # mul/add ride the (slack-rich) VPU.  More accurate than approx-recip.
    return 0.5 + 0.5 * jnp.tanh(0.5 * z)


def _mlp_kernel(x_ref, w1_ref, b1_ref, w2_ref, b2_ref, w3_ref, b3_ref, o_ref):
    # x arrives as f32; cast to the bf16 compute dtype in-kernel (VPU, free).
    x = x_ref[...].astype(w1_ref.dtype)
    # Layer 1: Linear(D_in -> 128) + sigmoid   (bf16 operands, f32 accumulate)
    h1 = jnp.dot(x, w1_ref[...], preferred_element_type=jnp.float32)
    h1 = _sigmoid(h1 + b1_ref[...])
    # Layer 2: Linear(128 -> 256) + sigmoid
    h2 = jnp.dot(h1.astype(w2_ref.dtype), w2_ref[...],
                 preferred_element_type=jnp.float32)
    h2 = _sigmoid(h2 + b2_ref[...])
    # Layer 3: Linear(256 -> n_classes padded to 128 lanes), logits
    h3 = jnp.dot(h2.astype(w3_ref.dtype), w3_ref[...],
                 preferred_element_type=jnp.float32)
    o_ref[...] = (h3 + b3_ref[...]).astype(o_ref.dtype)


def linear_classifier_forward(x, params, *, tile_b=2048,
                              compute_dtype=jnp.bfloat16,
                              out_dtype=jnp.bfloat16):
    """Fused forward pass.

    x: (B, D_in) float32.
    params: dict with w1/w2/w3 stored as (in, out) and b1/b2/b3 as (1, out).
    Returns (B, n_classes) logits in `out_dtype`.
    """
    w1, b1, w2, b2, w3, b3 = (params["w1"], params["b1"], params["w2"],
                              params["b2"], params["w3"], params["b3"])
    B, d_in = x.shape
    n_classes = w3.shape[1]

    # --- lane-pad the final layer so the output last dim is a multiple of 128
    n_pad = pl.cdiv(n_classes, _LANE) * _LANE
    w3p = jnp.pad(w3, ((0, 0), (0, n_pad - n_classes)))
    b3p = jnp.pad(b3, ((0, 0), (0, n_pad - n_classes)))

    # --- dtypes: bf16 matmul weights, f32 biases (bias-add/sigmoid in f32)
    w1c = w1.astype(compute_dtype)
    w2c = w2.astype(compute_dtype)
    w3c = w3p.astype(compute_dtype)
    b1f = b1.astype(jnp.float32)
    b2f = b2.astype(jnp.float32)
    b3f = b3p.astype(jnp.float32)

    # --- row-tile selection -------------------------------------------------
    if B <= _GRANULE:
        # tiny batch: a single (near-)exact tile, multiple of 8 sublanes
        tb = max(8, pl.cdiv(B, 8) * 8)
    else:
        tb = min(tile_b, pl.cdiv(B, _GRANULE) * _GRANULE)
        tb = pl.cdiv(tb, _GRANULE) * _GRANULE          # MXU M granule
        # keep >= 4 grid steps when batch allows (v7x: 2 TCs + lookahead;
        # harmless on v5e/v6e since tiles stay >= 256 rows)
        if B >= 4 * _GRANULE:
            tb = min(tb, (B // (4 * _GRANULE)) * _GRANULE)

    # --- VMEM footprint guard (v7x has 64 MiB/TC; scoped default 32 MiB) ----
    cbytes = jnp.dtype(compute_dtype).itemsize
    obytes = jnp.dtype(out_dtype).itemsize
    weight_bytes = 2 * ((w1c.size + w2c.size + w3c.size) * cbytes
                        + (b1f.size + b2f.size + b3f.size) * 4)

    def _footprint(t):
        io = 2 * (t * d_in * 4 + t * n_pad * obytes)   # double-buffered x/out
        act = t * (128 + 256 + n_pad) * 4              # f32 intermediates
        return weight_bytes + io + act + (4 << 20)     # + headroom

    # TODO(synk): for very large d_in on v7x, tile the K axis of layer 1 with
    # an extra "arbitrary" grid axis + f32 accumulator instead of only
    # shrinking tb.
    while _footprint(tb) > (40 << 20) and tb > 8:
        tb = max(8, (tb // 2) // 8 * 8)

    vmem_limit = int(min(max(_footprint(tb), 8 << 20), 48 << 20))
    grid = (pl.cdiv(B, tb),)   # no batch pad: edge block handled by Pallas
                               # (row-independent math; OOB stores dropped)

    # Weights/biases: one full block, constant index_map -> resident in VMEM.
    def resident(a):
        return pl.BlockSpec(a.shape, lambda i: (0,) * a.ndim)

    # Advisory cost estimate for XLA scheduling around the custom call.
    flops = 2 * B * (d_in * 128 + 128 * 256 + 256 * n_pad)
    transcendentals = B * (128 + 256)
    bytes_accessed = (B * d_in * 4
                      + (w1c.size + w2c.size + w3c.size) * cbytes
                      + (b1f.size + b2f.size + b3f.size) * 4
                      + B * n_pad * obytes)

    out_padded = pl.pallas_call(
        _mlp_kernel,
        out_shape=jax.ShapeDtypeStruct((B, n_pad), out_dtype),
        grid=grid,
        in_specs=[
            pl.BlockSpec((tb, d_in), lambda i: (i, 0)),   # x: tiled over rows
            resident(w1c), resident(b1f),
            resident(w2c), resident(b2f),
            resident(w3c), resident(b3f),
        ],
        out_specs=pl.BlockSpec((tb, n_pad), lambda i: (i, 0)),
        compiler_params=pltpu.CompilerParams(
            dimension_semantics=("parallel",),
            vmem_limit_bytes=vmem_limit),
        cost_estimate=pl.CostEstimate(
            flops=flops,
            transcendentals=transcendentals,
            bytes_accessed=bytes_accessed),
    )(x, w1c, b1f, w2c, b2f, w3c, b3f)

    return out_padded[:, :n_classes]


def init_params(key, input_dim, n_classes):
    """Deterministic init mirroring nn.Linear shapes (stored as (in, out))."""
    k1, k2, k3, k4, k5, k6 = jax.random.split(key, 6)

    def linear_init(kw, kb, fan_in, fan_out):
        # PyTorch default: U(-1/sqrt(fan_in), 1/sqrt(fan_in))
        bound = 1.0 / jnp.sqrt(fan_in)
        w = jax.random.uniform(kw, (fan_in, fan_out), jnp.float32, -bound, bound)
        b = jax.random.uniform(kb, (1, fan_out), jnp.float32, -bound, bound)
        return w, b

    w1, b1 = linear_init(k1, k2, input_dim, 128)
    w2, b2 = linear_init(k3, k4, 128, 256)
    w3, b3 = linear_init(k5, k6, 256, n_classes)
    return {"w1": w1, "b1": b1, "w2": w2, "b2": b2, "w3": w3, "b3": b3}


if __name__ == "__main__":
    key = jax.random.PRNGKey(0)
    kx, kp = jax.random.split(key)

    batch = 8
    input_dim = 32      # input_dims of the classifier
    n_classes = 10

    x = jax.random.normal(kx, (batch, input_dim), dtype=jnp.float32)
    params = init_params(kp, input_dim, n_classes)

    fwd = jax.jit(linear_classifier_forward)
    out = jax.block_until_ready(fwd(x, params))

    # Reference check in plain f32 JAX. Kernel uses bf16 matmul operands
    # (f32 accumulation) + bf16 output store, so tolerance is ~1e-2 scale.
    h1 = jax.nn.sigmoid(x @ params["w1"] + params["b1"])
    h2 = jax.nn.sigmoid(h1 @ params["w2"] + params["b2"])
    ref = h2 @ params["w3"] + params["b3"]
    out_f32 = out.astype(jnp.float32)
    assert out.shape == (batch, n_classes)
    assert jnp.allclose(out_f32, ref, atol=3e-2, rtol=3e-2), (
        float(jnp.max(jnp.abs(out_f32 - ref))))

    print("KERNEL_OK")
</pallas_src>

<mosaic_0001>
module attributes {stable_mosaic.version = 11 : i64} {
  func.func @_mlp_kernel(%arg0: i32, %arg1: memref<8x32xf32, #tpu.memory_space<vmem>>, %arg2: memref<32x128xbf16, #tpu.memory_space<vmem>>, %arg3: memref<1x128xf32, #tpu.memory_space<vmem>>, %arg4: memref<128x256xbf16, #tpu.memory_space<vmem>>, %arg5: memref<1x256xf32, #tpu.memory_space<vmem>>, %arg6: memref<256x128xbf16, #tpu.memory_space<vmem>>, %arg7: memref<1x128xf32, #tpu.memory_space<vmem>>, %arg8: memref<8x128xbf16, #tpu.memory_space<vmem>>) attributes {dimension_semantics = [#tpu.dimension_semantics<parallel>], iteration_bounds = array<i64: 1>, scalar_prefetch = 0 : i64, scratch_operands = 0 : i64, tpu.core_type = #tpu.core_type<tc>, window_params = [{transform_indices = @transform_0, window_bounds = array<i64: 8, 32>}, {pipeline_mode = #tpu.pipeline_mode<synchronous>, transform_indices = @transform_1, window_bounds = array<i64: 32, 128>}, {pipeline_mode = #tpu.pipeline_mode<synchronous>, transform_indices = @transform_2, window_bounds = array<i64: 1, 128>}, {pipeline_mode = #tpu.pipeline_mode<synchronous>, transform_indices = @transform_3, window_bounds = array<i64: 128, 256>}, {pipeline_mode = #tpu.pipeline_mode<synchronous>, transform_indices = @transform_4, window_bounds = array<i64: 1, 256>}, {pipeline_mode = #tpu.pipeline_mode<synchronous>, transform_indices = @transform_5, window_bounds = array<i64: 256, 128>}, {pipeline_mode = #tpu.pipeline_mode<synchronous>, transform_indices = @transform_6, window_bounds = array<i64: 1, 128>}, {transform_indices = @transform_7, window_bounds = array<i64: 8, 128>}]} {
    %c0 = arith.constant 0 : index
    %c0_0 = arith.constant 0 : index
    %0 = vector.load %arg1[%c0, %c0_0] : memref<8x32xf32, #tpu.memory_space<vmem>>, vector<8x32xf32>
    %1 = arith.truncf %0 : vector<8x32xf32> to vector<8x32xbf16>
    %c0_1 = arith.constant 0 : index
    %c0_2 = arith.constant 0 : index
    %2 = vector.load %arg2[%c0_1, %c0_2] : memref<32x128xbf16, #tpu.memory_space<vmem>>, vector<32x128xbf16>
    %cst = arith.constant dense<0.000000e+00> : vector<8x128xf32>
    %3 = tpu.matmul %1, %2, %cst {dimension_numbers = #tpu.dot_dimension_numbers<[1], [0], [0], [1], [0, 0, 1, 1], [], []>} : vector<8x32xbf16>, vector<32x128xbf16>, vector<8x128xf32> -> vector<8x128xf32>
    %c0_3 = arith.constant 0 : index
    %c0_4 = arith.constant 0 : index
    %4 = vector.load %arg3[%c0_3, %c0_4] : memref<1x128xf32, #tpu.memory_space<vmem>>, vector<1x128xf32>
    %5 = vector.broadcast %4 : vector<1x128xf32> to vector<8x128xf32>
    %6 = arith.addf %3, %5 : vector<8x128xf32>
    %cst_5 = arith.constant 5.000000e-01 : f32
    %7 = vector.broadcast %cst_5 : f32 to vector<8x128xf32>
    %8 = arith.mulf %7, %6 : vector<8x128xf32>
    %9 = math.tanh %8 : vector<8x128xf32>
    %cst_6 = arith.constant 5.000000e-01 : f32
    %10 = vector.broadcast %cst_6 : f32 to vector<8x128xf32>
    %11 = arith.mulf %10, %9 : vector<8x128xf32>
    %cst_7 = arith.constant 5.000000e-01 : f32
    %12 = vector.broadcast %cst_7 : f32 to vector<8x128xf32>
    %13 = arith.addf %12, %11 : vector<8x128xf32>
    %14 = arith.truncf %13 : vector<8x128xf32> to vector<8x128xbf16>
    %c0_8 = arith.constant 0 : index
    %c0_9 = arith.constant 0 : index
    %15 = vector.load %arg4[%c0_8, %c0_9] : memref<128x256xbf16, #tpu.memory_space<vmem>>, vector<128x256xbf16>
    %cst_10 = arith.constant dense<0.000000e+00> : vector<8x256xf32>
    %16 = tpu.matmul %14, %15, %cst_10 {dimension_numbers = #tpu.dot_dimension_numbers<[1], [0], [0], [1], [0, 0, 1, 1], [], []>} : vector<8x128xbf16>, vector<128x256xbf16>, vector<8x256xf32> -> vector<8x256xf32>
    %c0_11 = arith.constant 0 : index
    %c0_12 = arith.constant 0 : index
    %17 = vector.load %arg5[%c0_11, %c0_12] : memref<1x256xf32, #tpu.memory_space<vmem>>, vector<1x256xf32>
    %18 = vector.broadcast %17 : vector<1x256xf32> to vector<8x256xf32>
    %19 = arith.addf %16, %18 : vector<8x256xf32>
    %cst_13 = arith.constant 5.000000e-01 : f32
    %20 = vector.broadcast %cst_13 : f32 to vector<8x256xf32>
    %21 = arith.mulf %20, %19 : vector<8x256xf32>
    %22 = math.tanh %21 : vector<8x256xf32>
    %cst_14 = arith.constant 5.000000e-01 : f32
    %23 = vector.broadcast %cst_14 : f32 to vector<8x256xf32>
    %24 = arith.mulf %23, %22 : vector<8x256xf32>
    %cst_15 = arith.constant 5.000000e-01 : f32
    %25 = vector.broadcast %cst_15 : f32 to vector<8x256xf32>
    %26 = arith.addf %25, %24 : vector<8x256xf32>
    %27 = arith.truncf %26 : vector<8x256xf32> to vector<8x256xbf16>
    %c0_16 = arith.constant 0 : index
    %c0_17 = arith.constant 0 : index
    %28 = vector.load %arg6[%c0_16, %c0_17] : memref<256x128xbf16, #tpu.memory_space<vmem>>, vector<256x128xbf16>
    %cst_18 = arith.constant dense<0.000000e+00> : vector<8x128xf32>
    %29 = tpu.matmul %27, %28, %cst_18 {dimension_numbers = #tpu.dot_dimension_numbers<[1], [0], [0], [1], [0, 0, 1, 1], [], []>} : vector<8x256xbf16>, vector<256x128xbf16>, vector<8x128xf32> -> vector<8x128xf32>
    %c0_19 = arith.constant 0 : index
    %c0_20 = arith.constant 0 : index
    %30 = vector.load %arg7[%c0_19, %c0_20] : memref<1x128xf32, #tpu.memory_space<vmem>>, vector<1x128xf32>
    %31 = vector.broadcast %30 : vector<1x128xf32> to vector<8x128xf32>
    %32 = arith.addf %29, %31 : vector<8x128xf32>
    %33 = arith.truncf %32 : vector<8x128xf32> to vector<8x128xbf16>
    %c0_21 = arith.constant 0 : index
    %c0_22 = arith.constant 0 : index
    %34 = vector.load %arg8[%c0_21, %c0_22] : memref<8x128xbf16, #tpu.memory_space<vmem>>, vector<8x128xbf16>
    tpu.vector_store %arg8[%c0_21, %c0_22], %33 {strides = array<i32>} : memref<8x128xbf16, #tpu.memory_space<vmem>>, vector<8x128xbf16>,
    return
  }
  func.func @transform_0(%arg0: i32) -> (i32, i32) {
    %c0_i32 = arith.constant 0 : i32
    %c0_i32_0 = arith.constant 0 : i32
    return %arg0, %c0_i32 : i32, i32
  }
  func.func @transform_1(%arg0: i32) -> (i32, i32) {
    %c0_i32 = arith.constant 0 : i32
    %c0_i32_0 = arith.constant 0 : i32
    %c0_i32_1 = arith.constant 0 : i32
    return %c0_i32, %c0_i32_0 : i32, i32
  }
  func.func @transform_2(%arg0: i32) -> (i32, i32) {
    %c0_i32 = arith.constant 0 : i32
    %c0_i32_0 = arith.constant 0 : i32
    %c0_i32_1 = arith.constant 0 : i32
    return %c0_i32, %c0_i32_0 : i32, i32
  }
  func.func @transform_3(%arg0: i32) -> (i32, i32) {
    %c0_i32 = arith.constant 0 : i32
    %c0_i32_0 = arith.constant 0 : i32
    %c0_i32_1 = arith.constant 0 : i32
    return %c0_i32, %c0_i32_0 : i32, i32
  }
  func.func @transform_4(%arg0: i32) -> (i32, i32) {
    %c0_i32 = arith.constant 0 : i32
    %c0_i32_0 = arith.constant 0 : i32
    %c0_i32_1 = arith.constant 0 : i32
    return %c0_i32, %c0_i32_0 : i32, i32
  }
  func.func @transform_5(%arg0: i32) -> (i32, i32) {
    %c0_i32 = arith.constant 0 : i32
    %c0_i32_0 = arith.constant 0 : i32
    %c0_i32_1 = arith.constant 0 : i32
    return %c0_i32, %c0_i32_0 : i32, i32
  }
  func.func @transform_6(%arg0: i32) -> (i32, i32) {
    %c0_i32 = arith.constant 0 : i32
    %c0_i32_0 = arith.constant 0 : i32
    %c0_i32_1 = arith.constant 0 : i32
    return %c0_i32, %c0_i32_0 : i32, i32
  }
  func.func @transform_7(%arg0: i32) -> (i32, i32) {
    %c0_i32 = arith.constant 0 : i32
    %c0_i32_0 = arith.constant 0 : i32
    return %arg0, %c0_i32 : i32, i32
  }
}

</mosaic_0001>

<llo_original>
// kernel: linear_classifier_forward.1
$region0: #{linear_classifier_forward.1}
  #allocation0 [shape = 'u32[]', space=smem, size = 0x4, offset = 0x4, fixed_abs, tag = 'smem constant byte address 0x4 - core index']
  #allocation1 [shape = 'u32[144,128]{1,0:T(1,128)}', space=vmem, size = 0x12000, scoped, tag = 'internal scratch']
  %s0 = inlined_call_operand.vmem [shape: f32[8,32], index: 0, kind: input, shape index: {}]
  %s1 = inlined_call_operand.vmem [shape: bf16[32,128], index: 1, kind: input, shape index: {}]
  %s2 = inlined_call_operand.vmem [shape: f32[1,128], index: 2, kind: input, shape index: {}]
  %s3 = inlined_call_operand.vmem [shape: bf16[128,256], index: 3, kind: input, shape index: {}]
  %s4 = inlined_call_operand.vmem [shape: f32[1,256], index: 4, kind: input, shape index: {}]
  %s5 = inlined_call_operand.vmem [shape: bf16[256,128], index: 5, kind: input, shape index: {}]
  %s6 = inlined_call_operand.vmem [shape: f32[1,128], index: 6, kind: input, shape index: {}]
  %s7 = inlined_call_operand.hbm [shape: bf16[8,128], index: 7, kind: output, shape index: {}]
  %s8 = sld [smem:[#allocation0]]
  $region38: #{linear_classifier_forward.1} parent=0
    _
  %s10 = ssub.s32 1, %s8
  %s11 = scalar_select 0, %s10, %s8
  $region1: #{linear_classifier_forward.1} parent=0
    #allocation2 [shape = 'u8[2048]{0}', space=vmem, size = 0x800, scoped, tag = 'output window, operand 0, single buffered']
    #allocation3 [shape = 's32[1]{0}', space=sflag, size = 0x4, scoped, tag = 'scoped memory for linear_classifier_forward.1']
    %12 = vsyncpa [#allocation3], 0
    // Predicated region
    $region2: #{linear_classifier_forward.1} parent=1 // pred_check
      _
    $region3: #{linear_classifier_forward.1} parent=1 // pred_check_branch
      %14 = sbr.rel (0) target = $region5
    $region4: #{linear_classifier_forward.1} parent=1 // pred_region
      _
    $region5: #{linear_classifier_forward.1} parent=1 // pred_fallthru
      _
    // Predicated region
    $region6: #{linear_classifier_forward.1} parent=1 // pred_check
      _
    $region7: #{linear_classifier_forward.1} parent=1 // pred_check_branch
      %16 = sbr.rel (0) target = $region9
    $region8: #{linear_classifier_forward.1} parent=1 // pred_region
      _
    $region9: #{linear_classifier_forward.1} parent=1 // pred_fallthru
      _
    // Predicated region
    $region10: #{linear_classifier_forward.1} parent=1 // pred_check
      _
    $region11: #{linear_classifier_forward.1} parent=1 // pred_check_branch
      %18 = sbr.rel (0) target = $region13
    $region12: #{linear_classifier_forward.1} parent=1 // pred_region
      _
    $region13: #{linear_classifier_forward.1} parent=1 // pred_fallthru
      _
    // Predicated region
    $region14: #{linear_classifier_forward.1} parent=1 // pred_check
      _
    $region15: #{linear_classifier_forward.1} parent=1 // pred_check_branch
      %20 = sbr.rel (0) target = $region17
    $region16: #{linear_classifier_forward.1} parent=1 // pred_region
      _
    $region17: #{linear_classifier_forward.1} parent=1 // pred_fallthru
      _
    // Predicated region
    $region18: #{linear_classifier_forward.1} parent=1 // pred_check
      _
    $region19: #{linear_classifier_forward.1} parent=1 // pred_check_branch
      %22 = sbr.rel (0) target = $region21
    $region20: #{linear_classifier_forward.1} parent=1 // pred_region
      _
    $region21: #{linear_classifier_forward.1} parent=1 // pred_fallthru
      _
    // Predicated region
    $region22: #{linear_classifier_forward.1} parent=1 // pred_check
      _
    $region23: #{linear_classifier_forward.1} parent=1 // pred_check_branch
      %24 = sbr.rel (0) target = $region25
    $region24: #{linear_classifier_forward.1} parent=1 // pred_region
      _
    $region25: #{linear_classifier_forward.1} parent=1 // pred_fallthru
      _
    // Predicated region
    $region26: #{linear_classifier_forward.1} parent=1 // pred_check
      _
    $region27: #{linear_classifier_forward.1} parent=1 // pred_check_branch
      %26 = sbr.rel (0) target = $region29
    $region28: #{linear_classifier_forward.1} parent=1 // pred_region
      _
    $region29: #{linear_classifier_forward.1} parent=1 // pred_fallthru
      _
    %v28 = vld [vmem:[%s0] sm:$0xff]
    %v29 = vpack.c.bf16 %v28, %v28
    %v30 = vld [vmem:[%s1] sm:$0xf]
    %v31 = vld [vmem:[%s1 + $0x4] sm:$0xf]
    %v32 = vld [vmem:[%s1 + $0x8] sm:$0xf]
    %v33 = vld [vmem:[%s1 + $0xc] sm:$0xf]
    %v34 = vld [vmem:[%s2] sm:$0x1]
    %v36 = vlaneseq
    %v37 = vshrl.u32 %v36, 7
    %v38 = vsub.s32 0, %v37
    %v39 = vrot.slane %v34, %v38
    %v45 = vunpack.c.l.b16 %v30
    %v46 = vunpack.c.l.b16 %v31
    %v47 = vunpack.c.l.b16 %v32
    %v48 = vunpack.c.l.b16 %v33
    %v49 = vpack.c.b16 %v46, %v45
    %v50 = vpack.c.b16 %v48, %v47
    %vm53 = vcmask 261120
    %v55 = vsel %vm53, %v29, 0
    %57 = vmatprep.subr.bf16.mxu0 0
    %58 = vmatpush1.bf16.msra.mxu0 %v49
    %59 = vmatprep.subr.bf16.mxu0 0
    %60 = vmatpush1.bf16.msra.mxu0 %v50
    %61 = vmatprep.subr.bf16.mxu0 0
    %62 = vmatpush1.bf16.msra.mxu0 0
    %63 = vmatprep.subr.bf16.mxu0 0
    %64 = vmatpush1.bf16.msra.mxu0 0
    %65 = vmatprep.subr.bf16.mxu0 0
    %66 = vmatpush1.bf16.msra.mxu0 0
    %67 = vmatprep.subr.bf16.mxu0 0
    %68 = vmatpush1.bf16.msra.mxu0 0
    %69 = vmatprep.subr.bf16.mxu0 0
    %70 = vmatpush1.bf16.msra.mxu0 0
    %71 = vmatprep.subr.bf16.mxu0 0
    %72 = vmatpush1.bf16.msra.mxu0 0
    %73 = vmatprep.subr.bf16.mxu0 0
    %74 = vmatpush1.bf16.msra.mxu0 0
    %75 = vmatprep.subr.bf16.mxu0 0
    %76 = vmatpush1.bf16.msra.mxu0 0
    %77 = vmatprep.subr.bf16.mxu0 0
    %78 = vmatpush1.bf16.msra.mxu0 0
    %79 = vmatprep.subr.bf16.mxu0 0
    %80 = vmatpush1.bf16.msra.mxu0 0
    %81 = vmatprep.subr.bf16.mxu0 0
    %82 = vmatpush1.bf16.msra.mxu0 0
    %83 = vmatprep.subr.bf16.mxu0 0
    %84 = vmatpush1.bf16.msra.mxu0 0
    %85 = vmatprep.subr.bf16.mxu0 0
    %86 = vmatpush1.bf16.msra.mxu0 0
    %87 = vmatprep.subr.bf16.mxu0 0
    %88 = vmatpush1.bf16.msra.mxu0 0
    %89 = vmatprep.mubr.bf16.mxu0 0
    %90 = vmatmul.mubr.bf16.gmra.mrb[0].mxu0 %v55
    %v91 = vpop.f32.mrb[0].mxu0
    %v92 = vadd.f32 %v39, %v91
    %v93 = vpop.f32.mrb[0].mxu0
    %v94 = vpop.f32.mrb[0].mxu0
    %v95 = vpop.f32.mrb[0].mxu0
    %96 = vdwg.mxu0
    %v97 = vmul.f32 %v92, 0.5
    %v98 = vtanh.pop %v97
    %v99 = vmul.f32 %v98, 0.5
    %v100 = vadd.f32 %v99, 0.5
    %v101 = vpack.c.bf16 %v100, %v100
    %v102 = vld [vmem:[%s3] sm:$0xff]
    %v103 = vld [vmem:[%s3 + $0x8] sm:$0xff]
    %v104 = vld [vmem:[%s3 + $0x10] sm:$0xff]
    %v105 = vld [vmem:[%s3 + $0x18] sm:$0xff]
    %v106 = vld [vmem:[%s3 + $0x20] sm:$0xff]
    %v107 = vld [vmem:[%s3 + $0x28] sm:$0xff]
    %v108 = vld [vmem:[%s3 + $0x30] sm:$0xff]
    %v109 = vld [vmem:[%s3 + $0x38] sm:$0xff]
    %v110 = vld [vmem:[%s3 + $0x40] sm:$0xff]
    %v111 = vld [vmem:[%s3 + $0x48] sm:$0xff]
    %v112 = vld [vmem:[%s3 + $0x50] sm:$0xff]
    %v113 = vld [vmem:[%s3 + $0x58] sm:$0xff]
    %v114 = vld [vmem:[%s3 + $0x60] sm:$0xff]
    %v115 = vld [vmem:[%s3 + $0x68] sm:$0xff]
    %v116 = vld [vmem:[%s3 + $0x70] sm:$0xff]
    %v117 = vld [vmem:[%s3 + $0x78] sm:$0xff]
    %v118 = vld [vmem:[%s4] sm:$0x3]
    %v120 = vlaneseq
    %v121 = vshrl.u32 %v120, 7
    %v122 = vsub.s32 0, %v121
    %v123 = vrot.slane %v118, %v122
    %v124 = vlaneseq
    %v125 = vshrl.u32 %v124, 7
    %v126 = vsub.s32 1, %v125
    %v127 = vrot.slane %v118, %v126
    %v146 = vunpack.c.l.b16 %v102
    %v147 = vunpack.c.h.b16 %v102
    %v148 = vunpack.c.l.b16 %v103
    %v149 = vunpack.c.h.b16 %v103
    %v150 = vunpack.c.l.b16 %v104
    %v151 = vunpack.c.h.b16 %v104
    %v152 = vunpack.c.l.b16 %v105
    %v153 = vunpack.c.h.b16 %v105
    %v154 = vunpack.c.l.b16 %v106
    %v155 = vunpack.c.h.b16 %v106
    %v156 = vunpack.c.l.b16 %v107
    %v157 = vunpack.c.h.b16 %v107
    %v158 = vunpack.c.l.b16 %v108
    %v159 = vunpack.c.h.b16 %v108
    %v160 = vunpack.c.l.b16 %v109
    %v161 = vunpack.c.h.b16 %v109
    %v162 = vunpack.c.l.b16 %v110
    %v163 = vunpack.c.h.b16 %v110
    %v164 = vunpack.c.l.b16 %v111
    %v165 = vunpack.c.h.b16 %v111
    %v166 = vunpack.c.l.b16 %v112
    %v167 = vunpack.c.h.b16 %v112
    %v168 = vunpack.c.l.b16 %v113
    %v169 = vunpack.c.h.b16 %v113
    %v170 = vunpack.c.l.b16 %v114
    %v171 = vunpack.c.h.b16 %v114
    %v172 = vunpack.c.l.b16 %v115
    %v173 = vunpack.c.h.b16 %v115
    %v174 = vunpack.c.l.b16 %v116
    %v175 = vunpack.c.h.b16 %v116
    %v176 = vunpack.c.l.b16 %v117
    %v177 = vunpack.c.h.b16 %v117
    %v178 = vpack.c.b16 %v148, %v146
    %v179 = vpack.c.b16 %v149, %v147
    %v180 = vpack.c.b16 %v152, %v150
    %v181 = vpack.c.b16 %v153, %v151
    %v182 = vpack.c.b16 %v156, %v154
    %v183 = vpack.c.b16 %v157, %v155
    %v184 = vpack.c.b16 %v160, %v158
    %v185 = vpack.c.b16 %v161, %v159
    %v186 = vpack.c.b16 %v164, %v162
    %v187 = vpack.c.b16 %v165, %v163
    %v188 = vpack.c.b16 %v168, %v166
    %v189 = vpack.c.b16 %v169, %v167
    %v190 = vpack.c.b16 %v172, %v170
    %v191 = vpack.c.b16 %v173, %v171
    %v192 = vpack.c.b16 %v176, %v174
    %v193 = vpack.c.b16 %v177, %v175
    %210 = vmatprep.subr.bf16.mxu0 %v179
    %211 = vmatpush1.bf16.msra.mxu0 %v178
    %212 = vmatprep.subr.bf16.mxu0 %v181
    %213 = vmatpush1.bf16.msra.mxu0 %v180
    %214 = vmatprep.subr.bf16.mxu0 %v183
    %215 = vmatpush1.bf16.msra.mxu0 %v182
    %216 = vmatprep.subr.bf16.mxu0 %v185
    %217 = vmatpush1.bf16.msra.mxu0 %v184
    %218 = vmatprep.subr.bf16.mxu0 %v187
    %219 = vmatpush1.bf16.msra.mxu0 %v186
    %220 = vmatprep.subr.bf16.mxu0 %v189
    %221 = vmatpush1.bf16.msra.mxu0 %v188
    %222 = vmatprep.subr.bf16.mxu0 %v191
    %223 = vmatpush1.bf16.msra.mxu0 %v190
    %224 = vmatprep.subr.bf16.mxu0 %v193
    %225 = vmatpush1.bf16.msra.mxu0 %v192
    %226 = vmatprep.subr.bf16.mxu0 0
    %227 = vmatpush1.bf16.msra.mxu0 0
    %228 = vmatprep.subr.bf16.mxu0 0
    %229 = vmatpush1.bf16.msra.mxu0 0
    %230 = vmatprep.subr.bf16.mxu0 0
    %231 = vmatpush1.bf16.msra.mxu0 0
    %232 = vmatprep.subr.bf16.mxu0 0
    %233 = vmatpush1.bf16.msra.mxu0 0
    %234 = vmatprep.subr.bf16.mxu0 0
    %235 = vmatpush1.bf16.msra.mxu0 0
    %236 = vmatprep.subr.bf16.mxu0 0
    %237 = vmatpush1.bf16.msra.mxu0 0
    %238 = vmatprep.subr.bf16.mxu0 0
    %239 = vmatpush1.bf16.msra.mxu0 0
    %240 = vmatprep.subr.bf16.mxu0 0
    %241 = vmatpush1.bf16.msra.mxu0 0
    %242 = vmatprep.mubr.bf16.mxu0 0
    %243 = vmatmul.mubr.bf16.gmra.mrb[0].mxu0 %v101
    %v244 = vpop.f32.mrb[0].mxu0
    %v245 = vadd.f32 %v123, %v244
    %v246 = vpop.f32.mrb[0].mxu0
    %v247 = vadd.f32 %v127, %v246
    %v248 = vpop.f32.mrb[0].mxu0
    %v249 = vpop.f32.mrb[0].mxu0
    %250 = vdwg.mxu0
    %v251 = vmul.f32 %v245, 0.5
    %v252 = vmul.f32 %v247, 0.5
    %v253 = vtanh.pop %v251
    %v254 = vtanh.pop %v252
    %v255 = vmul.f32 %v253, 0.5
    %v256 = vmul.f32 %v254, 0.5
    %v257 = vadd.f32 %v255, 0.5
    %v258 = vadd.f32 %v256, 0.5
    %v259 = vpack.c.bf16 %v257, %v257
    %v260 = vpack.c.bf16 %v258, %v258
    %v261 = vld [vmem:[%s5] sm:$0xf]
    %v262 = vld [vmem:[%s5 + $0x4] sm:$0xf]
    %v263 = vld [vmem:[%s5 + $0x8] sm:$0xf]
    %v264 = vld [vmem:[%s5 + $0xc] sm:$0xf]
    %v265 = vld [vmem:[%s5 + $0x10] sm:$0xf]
    %v266 = vld [vmem:[%s5 + $0x14] sm:$0xf]
    %v267 = vld [vmem:[%s5 + $0x18] sm:$0xf]
    %v268 = vld [vmem:[%s5 + $0x1c] sm:$0xf]
    %v269 = vld [vmem:[%s5 + $0x20] sm:$0xf]
    %v270 = vld [vmem:[%s5 + $0x24] sm:$0xf]
    %v271 = vld [vmem:[%s5 + $0x28] sm:$0xf]
    %v272 = vld [vmem:[%s5 + $0x2c] sm:$0xf]
    %v273 = vld [vmem:[%s5 + $0x30] sm:$0xf]
    %v274 = vld [vmem:[%s5 + $0x34] sm:$0xf]
    %v275 = vld [vmem:[%s5 + $0x38] sm:$0xf]
    %v276 = vld [vmem:[%s5 + $0x3c] sm:$0xf]
    %v277 = vld [vmem:[%s5 + $0x40] sm:$0xf]
    %v278 = vld [vmem:[%s5 + $0x44] sm:$0xf]
    %v279 = vld [vmem:[%s5 + $0x48] sm:$0xf]
    %v280 = vld [vmem:[%s5 + $0x4c] sm:$0xf]
    %v281 = vld [vmem:[%s5 + $0x50] sm:$0xf]
    %v282 = vld [vmem:[%s5 + $0x54] sm:$0xf]
    %v283 = vld [vmem:[%s5 + $0x58] sm:$0xf]
    %v284 = vld [vmem:[%s5 + $0x5c] sm:$0xf]
    %v285 = vld [vmem:[%s5 + $0x60] sm:$0xf]
    %v286 = vld [vmem:[%s5 + $0x64] sm:$0xf]
    %v287 = vld [vmem:[%s5 + $0x68] sm:$0xf]
    %v288 = vld [vmem:[%s5 + $0x6c] sm:$0xf]
    %v289 = vld [vmem:[%s5 + $0x70] sm:$0xf]
    %v290 = vld [vmem:[%s5 + $0x74] sm:$0xf]
    %v291 = vld [vmem:[%s5 + $0x78] sm:$0xf]
    %v292 = vld [vmem:[%s5 + $0x7c] sm:$0xf]
    %v293 = vld [vmem:[%s6] sm:$0x1]
    %v295 = vlaneseq
    %v296 = vshrl.u32 %v295, 7
    %v297 = vsub.s32 0, %v296
    %v298 = vrot.slane %v293, %v297
    %v332 = vunpack.c.l.b16 %v261
    %v333 = vunpack.c.l.b16 %v262
    %v334 = vunpack.c.l.b16 %v263
    %v335 = vunpack.c.l.b16 %v264
    %v336 = vunpack.c.l.b16 %v265
    %v337 = vunpack.c.l.b16 %v266
    %v338 = vunpack.c.l.b16 %v267
    %v339 = vunpack.c.l.b16 %v268
    %v340 = vunpack.c.l.b16 %v269
    %v341 = vunpack.c.l.b16 %v270
    %v342 = vunpack.c.l.b16 %v271
    %v343 = vunpack.c.l.b16 %v272
    %v344 = vunpack.c.l.b16 %v273
    %v345 = vunpack.c.l.b16 %v274
    %v346 = vunpack.c.l.b16 %v275
    %v347 = vunpack.c.l.b16 %v276
    %v348 = vunpack.c.l.b16 %v277
    %v349 = vunpack.c.l.b16 %v278
    %v350 = vunpack.c.l.b16 %v279
    %v351 = vunpack.c.l.b16 %v280
    %v352 = vunpack.c.l.b16 %v281
    %v353 = vunpack.c.l.b16 %v282
    %v354 = vunpack.c.l.b16 %v283
    %v355 = vunpack.c.l.b16 %v284
    %v356 = vunpack.c.l.b16 %v285
    %v357 = vunpack.c.l.b16 %v286
    %v358 = vunpack.c.l.b16 %v287
    %v359 = vunpack.c.l.b16 %v288
    %v360 = vunpack.c.l.b16 %v289
    %v361 = vunpack.c.l.b16 %v290
    %v362 = vunpack.c.l.b16 %v291
    %v363 = vunpack.c.l.b16 %v292
    %v364 = vpack.c.b16 %v333, %v332
    %v365 = vpack.c.b16 %v335, %v334
    %v366 = vpack.c.b16 %v337, %v336
    %v367 = vpack.c.b16 %v339, %v338
    %v368 = vpack.c.b16 %v341, %v340
    %v369 = vpack.c.b16 %v343, %v342
    %v370 = vpack.c.b16 %v345, %v344
    %v371 = vpack.c.b16 %v347, %v346
    %v372 = vpack.c.b16 %v349, %v348
    %v373 = vpack.c.b16 %v351, %v350
    %v374 = vpack.c.b16 %v353, %v352
    %v375 = vpack.c.b16 %v355, %v354
    %v376 = vpack.c.b16 %v357, %v356
    %v377 = vpack.c.b16 %v359, %v358
    %v378 = vpack.c.b16 %v361, %v360
    %v379 = vpack.c.b16 %v363, %v362
    %396 = vmatprep.subr.bf16.mxu0 0
    %397 = vmatpush1.bf16.msra.mxu0 %v364
    %398 = vmatprep.subr.bf16.mxu0 0
    %399 = vmatpush1.bf16.msra.mxu0 %v365
    %400 = vmatprep.subr.bf16.mxu0 0
    %401 = vmatpush1.bf16.msra.mxu0 %v366
    %402 = vmatprep.subr.bf16.mxu0 0
    %403 = vmatpush1.bf16.msra.mxu0 %v367
    %404 = vmatprep.subr.bf16.mxu0 0
    %405 = vmatpush1.bf16.msra.mxu0 %v368
    %406 = vmatprep.subr.bf16.mxu0 0
    %407 = vmatpush1.bf16.msra.mxu0 %v369
    %408 = vmatprep.subr.bf16.mxu0 0
    %409 = vmatpush1.bf16.msra.mxu0 %v370
    %410 = vmatprep.subr.bf16.mxu0 0
    %411 = vmatpush1.bf16.msra.mxu0 %v371
    %412 = vmatprep.subr.bf16.mxu0 0
    %413 = vmatpush1.bf16.msra.mxu0 %v372
    %414 = vmatprep.subr.bf16.mxu0 0
    %415 = vmatpush1.bf16.msra.mxu0 %v373
    %416 = vmatprep.subr.bf16.mxu0 0
    %417 = vmatpush1.bf16.msra.mxu0 %v374
    %418 = vmatprep.subr.bf16.mxu0 0
    %419 = vmatpush1.bf16.msra.mxu0 %v375
    %420 = vmatprep.subr.bf16.mxu0 0
    %421 = vmatpush1.bf16.msra.mxu0 %v376
    %422 = vmatprep.subr.bf16.mxu0 0
    %423 = vmatpush1.bf16.msra.mxu0 %v377
    %424 = vmatprep.subr.bf16.mxu0 0
    %425 = vmatpush1.bf16.msra.mxu0 %v378
    %426 = vmatprep.subr.bf16.mxu0 0
    %427 = vmatpush1.bf16.msra.mxu0 %v379
    %428 = vmatprep.mubr.bf16.mxu0 %v260
    %429 = vmatmul.mubr.bf16.gmra.mrb[0].mxu0 %v259
    %v430 = vpop.f32.mrb[0].mxu0
    %v431 = vadd.f32 %v298, %v430
    %v432 = vpop.f32.mrb[0].mxu0
    %v433 = vpop.f32.mrb[0].mxu0
    %v434 = vpop.f32.mrb[0].mxu0
    %435 = vdwg.mxu0
    %v436 = vpack.c.bf16 %v431, %v431
    %437 = vst [vmem:[#allocation2] sm:$0xf] %v436
    // Predicated region
    $region30: #{linear_classifier_forward.1} parent=1 // pred_check
      _
    $region31: #{linear_classifier_forward.1} parent=1 // pred_check_branch
      %439 = sbr.rel (0) target = $region33
    $region32: #{linear_classifier_forward.1} parent=1 // pred_region
      %s441 = ssub.s32 64, 64
      %442 = vsyncadd [#allocation3], %s441
      %s444 = sshll.u32 [#allocation2], 4
      %s445 = int_to_ptr.vmem [resolvable:$true] %s444
      %447 = dma.vmem_to_hbm [thread:$0]  %s445, 64, %s7, [#allocation3]
    $region33: #{linear_classifier_forward.1} parent=1 // pred_fallthru
      _
    // Predicated region
    $region34: #{linear_classifier_forward.1} parent=1 // pred_check
      _
    $region35: #{linear_classifier_forward.1} parent=1 // pred_check_branch
      %449 = sbr.rel (0) target = $region37
    $region36: #{linear_classifier_forward.1} parent=1 // pred_region
      %450 = dma.done [#allocation3], 64
    $region37: #{linear_classifier_forward.1} parent=1 // pred_fallthru
      _
    %451 = vsyncpa [#allocation3], 1

</llo_original>
